<compile_context>
chip_gen: v5e
topology: v5e:2x2
jax: 0.10.0
libtpu: 0.0.40
codegen_flags: <defaults>
</compile_context>

<pallas_src>
import functools

import jax
import jax.numpy as jnp
from jax.experimental import pallas as pl
from jax.experimental.pallas import tpu as pltpu


def _round_up(x, m):
    return ((x + m - 1) // m) * m


def _cdiv(a, b):
    return -(-a // b)


# ---------------------------------------------------------------------------
# Kernels
# ---------------------------------------------------------------------------
def _ffn_resident_kernel(x_ref, w1_ref, b1_ref, w2_ref, b2_ref, o_ref,
                         *, compute_dtype):
    """Weights fully VMEM-resident; 1-D grid over row tiles; no accumulator."""
    x = x_ref[...].astype(compute_dtype)               # in-kernel cast (VPU)
    h = jnp.dot(x, w1_ref[...], preferred_element_type=jnp.float32)
    h = jnp.maximum(h + b1_ref[...], 0.0)               # bias + ReLU in f32
    # Dropout == identity in eval mode.
    y = jnp.dot(h.astype(w2_ref.dtype), w2_ref[...],
                preferred_element_type=jnp.float32)
    o_ref[...] = (y + b2_ref[...]).astype(o_ref.dtype)


def _ffn_stream_kernel(x_ref, w1_ref, b1_ref, w2_ref, b2_ref, o_ref, acc_ref,
                       *, compute_dtype):
    """d_ff streamed as a reduction grid axis (axis 1, 'arbitrary').

    Requires num_programs(1) >= 2 (the wrapper guarantees it; single-slice
    cases use the resident kernel).
    """
    k = pl.program_id(1)
    last = pl.num_programs(1) - 1

    x = x_ref[...].astype(compute_dtype)
    h = jnp.dot(x, w1_ref[...], preferred_element_type=jnp.float32)
    h = jnp.maximum(h + b1_ref[...], 0.0)
    contrib = jnp.dot(h.astype(w2_ref.dtype), w2_ref[...],
                      preferred_element_type=jnp.float32)

    @pl.when(k == 0)
    def _():
        acc_ref[...] = contrib                          # no zero-init pass

    @pl.when(jnp.logical_and(k > 0, k < last))
    def _():
        acc_ref[...] += contrib

    @pl.when(k == last)
    def _():
        # Fold the final slice + output bias into the writeback; saves one
        # tm x d_model f32 accumulator store+load per row tile.
        o_ref[...] = (acc_ref[...] + contrib + b2_ref[...]).astype(o_ref.dtype)


# ---------------------------------------------------------------------------
# Wrapper
# ---------------------------------------------------------------------------
def positionwise_ffn(x, w1, b1, w2, b2, *, tm=None, tk=512, compute_dtype=None,
                     _force_stream=False):
    """Fused Transformer FFN:  y = relu(x @ W1 + b1) @ W2 + b2.

    x:  (batch, seq, d_model)
    w1: (d_model, d_ff)   b1: (d_ff,)       (weights stored pre-transposed)
    w2: (d_ff, d_model)   b2: (d_model,)
    compute_dtype: dtype fed to the MXU (e.g. jnp.bfloat16); accumulation f32.
    """
    out_dtype = x.dtype
    batch, seq, d_model = x.shape
    d_ff = w1.shape[1]
    M = batch * seq

    if compute_dtype is None:
        compute_dtype = x.dtype
    compute_dtype = jnp.dtype(compute_dtype)
    in_bytes = compute_dtype.itemsize
    x_bytes = jnp.dtype(x.dtype).itemsize
    out_bytes = jnp.dtype(out_dtype).itemsize

    # Packed-dtype sublane multiple: 8 (f32), 16 (bf16), 32 (int8/fp8).
    sub = max(8, 32 // min(in_bytes, x_bytes, out_bytes))

    # --- chip info ------------------------------------------------------------
    try:
        vmem_cap = int(pltpu.get_tpu_info().vmem_capacity_bytes)
    except Exception:  # pragma: no cover - conservative fallback (v7x per-TC)
        vmem_cap = 64 * 1024 * 1024
    vmem_budget = int(0.8 * vmem_cap)

    try:
        kind = jax.devices()[0].device_kind.lower()
    except Exception:  # pragma: no cover
        kind = ""

    if tm is None:
        if "v5" in kind:
            tm_target = 256        # v5e is MXU-bound already at 256
        elif "v6" in kind:
            tm_target = 1024       # v6e needs ~650 flops/HBM-byte when streaming
        else:
            tm_target = 512        # v7x / unknown
    else:
        tm_target = tm

    M_sub = _round_up(M, sub)
    d_ff_r = _round_up(d_ff, 128)  # lane-aligned full d_ff (resident path)

    # --- VMEM estimators (double-buffered inputs/outputs, f32 intermediates) -
    def resident_need(tm_):
        return (2 * tm_ * d_model * (x_bytes + out_bytes)            # x / out
                + 2 * 2 * d_model * d_ff_r * in_bytes                # W1 + W2
                + 2 * (d_ff_r + d_model) * 4                         # biases
                + tm_ * d_ff_r * 4                                   # h (f32)
                + tm_ * d_model * 4)                                 # y (f32)

    def stream_need(tm_, tk_):
        return (2 * tm_ * d_model * (x_bytes + out_bytes)
                + 2 * 2 * d_model * tk_ * in_bytes                   # W1/W2 slices
                + 2 * (tk_ + d_model) * 4
                + tm_ * d_model * 4                                  # acc scratch
                + tm_ * tk_ * 4                                      # h (f32)
                + tm_ * d_model * 4)                                 # contrib (f32)

    # --- path & tile selection ------------------------------------------------
    tm_res = _round_up(min(max(tm_target, sub), 512, M_sub), sub)
    while tm_res > sub and resident_need(tm_res) > vmem_budget:
        tm_res = max(sub, _round_up(tm_res // 2, sub))
    use_resident = (not _force_stream
                    and resident_need(tm_res) <= vmem_budget
                    and (tm_res >= 256 or tm_res >= M_sub))

    if use_resident:
        tm_ = tm_res
        tk_ = d_ff_p = d_ff_r
    else:
        tm_ = min(_round_up(max(tm_target, sub), sub), M_sub)
        tk0 = min(_round_up(max(tk, 128), 128), d_ff_r)
        steps = _cdiv(d_ff, tk0)
        tk_ = _round_up(_cdiv(d_ff, steps), 128)   # divisor-balanced: min padding
        d_ff_p = steps * tk_
        # Shrink tk first (preserve arithmetic intensity via tm), then tm.
        while stream_need(tm_, tk_) > vmem_budget and tk_ > 128:
            steps = _cdiv(d_ff, max(128, tk_ // 2))
            tk_ = _round_up(_cdiv(d_ff, steps), 128)
            d_ff_p = steps * tk_
        while stream_need(tm_, tk_) > vmem_budget and tm_ > sub:
            tm_ = max(sub, _round_up(tm_ // 2, sub))
        if d_ff_p // tk_ == 1:
            # Degenerate single-slice stream: the simpler resident kernel is
            # both correct and cheaper here.
            use_resident = True
            d_ff_r = d_ff_p

    # Keep >= 2 row tiles when there is enough work so both v7x TensorCores
    # (M axis is "parallel") get a share.
    if tm_ >= M_sub and M_sub >= 512:
        tm_ = _round_up(_cdiv(M_sub, 2), sub)

    M_p = _round_up(M, tm_)
    need = resident_need(tm_) if use_resident else stream_need(tm_, tk_)
    vmem_limit = min(max(32 * 1024 * 1024, need * 3 // 2), vmem_budget)

    # --- wrapper-side prep (weights/biases only; x stays in native dtype) -----
    x2d = x.reshape(M, d_model)
    if M_p != M:
        x2d = jnp.pad(x2d, ((0, M_p - M), (0, 0)))

    w1c = w1 if w1.dtype == compute_dtype else w1.astype(compute_dtype)
    w2c = w2 if w2.dtype == compute_dtype else w2.astype(compute_dtype)
    b1f = b1.astype(jnp.float32)
    b2f = b2.astype(jnp.float32)
    if d_ff_p != d_ff:
        # Zero-padded d_ff slices are exact: relu(0 + 0) = 0 and zero rows of
        # W2 contribute nothing.
        w1c = jnp.pad(w1c, ((0, 0), (0, d_ff_p - d_ff)))
        w2c = jnp.pad(w2c, ((0, d_ff_p - d_ff), (0, 0)))
        b1f = jnp.pad(b1f, (0, d_ff_p - d_ff))
    b1_2d = b1f.reshape(1, d_ff_p)
    b2_2d = b2f.reshape(1, d_model)

    # --- scheduler hint --------------------------------------------------------
    n_row_tiles = M_p // tm_
    weight_reads = 1 if use_resident else n_row_tiles
    cost = pl.CostEstimate(
        flops=4 * M_p * d_model * d_ff_p,                # two matmuls
        transcendentals=0,
        bytes_accessed=(M_p * d_model * (x_bytes + out_bytes)
                        + weight_reads * 2 * d_model * d_ff_p * in_bytes
                        + (d_ff_p + d_model) * 4),
    )

    # --- pallas_call -----------------------------------------------------------
    if use_resident:
        kernel = functools.partial(_ffn_resident_kernel,
                                   compute_dtype=compute_dtype)
        grid_spec = pltpu.PrefetchScalarGridSpec(
            num_scalar_prefetch=0,
            grid=(n_row_tiles,),
            in_specs=[
                pl.BlockSpec((tm_, d_model), lambda i: (i, 0)),      # x row tile
                pl.BlockSpec((d_model, d_ff_p), lambda i: (0, 0)),   # W1 (resident)
                pl.BlockSpec((1, d_ff_p), lambda i: (0, 0)),         # b1
                pl.BlockSpec((d_ff_p, d_model), lambda i: (0, 0)),   # W2 (resident)
                pl.BlockSpec((1, d_model), lambda i: (0, 0)),        # b2
            ],
            out_specs=pl.BlockSpec((tm_, d_model), lambda i: (i, 0)),
        )
        dims = ("parallel",)
    else:
        kernel = functools.partial(_ffn_stream_kernel,
                                   compute_dtype=compute_dtype)
        grid_spec = pltpu.PrefetchScalarGridSpec(
            num_scalar_prefetch=0,
            grid=(n_row_tiles, d_ff_p // tk_),
            in_specs=[
                pl.BlockSpec((tm_, d_model), lambda i, k: (i, 0)),   # x row tile
                pl.BlockSpec((d_model, tk_), lambda i, k: (0, k)),   # W1 slice
                pl.BlockSpec((1, tk_), lambda i, k: (0, k)),         # b1 slice
                pl.BlockSpec((tk_, d_model), lambda i, k: (k, 0)),   # W2 slice
                pl.BlockSpec((1, d_model), lambda i, k: (0, 0)),     # b2
            ],
            out_specs=pl.BlockSpec((tm_, d_model), lambda i, k: (i, 0)),
            scratch_shapes=[pltpu.VMEM((tm_, d_model), jnp.float32)],
        )
        dims = ("parallel", "arbitrary")

    out2d = pl.pallas_call(
        kernel,
        out_shape=jax.ShapeDtypeStruct((M_p, d_model), out_dtype),
        grid_spec=grid_spec,
        compiler_params=pltpu.CompilerParams(
            dimension_semantics=dims,
            vmem_limit_bytes=vmem_limit,
        ),
        cost_estimate=cost,
    )(x2d, w1c, b1_2d, w2c, b2_2d)

    if M_p != M:
        out2d = out2d[:M]
    return out2d.reshape(batch, seq, d_model)


def init_params(key, d_model, d_ff, dtype=jnp.float32):
    """Deterministic init mimicking nn.Linear default (uniform +/- 1/sqrt(fan_in))."""
    k1, k2, k3, k4 = jax.random.split(key, 4)
    lim1 = 1.0 / (d_model ** 0.5)
    lim2 = 1.0 / (d_ff ** 0.5)
    # stored pre-transposed: (in_features, out_features)
    w1 = jax.random.uniform(k1, (d_model, d_ff), dtype, -lim1, lim1)
    b1 = jax.random.uniform(k2, (d_ff,), dtype, -lim1, lim1)
    w2 = jax.random.uniform(k3, (d_ff, d_model), dtype, -lim2, lim2)
    b2 = jax.random.uniform(k4, (d_model,), dtype, -lim2, lim2)
    return w1, b1, w2, b2


if __name__ == "__main__":
    key = jax.random.PRNGKey(0)
    kx, kp = jax.random.split(key)

    # Small shapes consistent with a Transformer FFN.
    batch, seq, d_model, d_ff = 2, 8, 128, 256
    x = jax.random.normal(kx, (batch, seq, d_model), jnp.float32)
    w1, b1, w2, b2 = init_params(kp, d_model, d_ff)

    # Pure-JAX reference (eval-mode dropout = identity).
    ref = jnp.maximum(x @ w1 + b1, 0.0) @ w2 + b2

    # f32 weight-resident path (tight tolerance).
    y = jax.block_until_ready(positionwise_ffn(x, w1, b1, w2, b2))
    assert y.shape == (batch, seq, d_model)
    assert jnp.allclose(y, ref, atol=1e-4, rtol=1e-4)

    # bf16 MXU path (production path on v6e/v7x), looser tolerance vs f32 ref.
    y_bf16 = jax.block_until_ready(
        positionwise_ffn(x, w1, b1, w2, b2, compute_dtype=jnp.bfloat16))
    assert jnp.allclose(y_bf16, ref, atol=1e-1, rtol=1e-1)

    # Ragged shape: exercises row padding (weight-resident path).
    batch2, seq2, d_ff2 = 2, 37, 640
    x2 = jax.random.normal(kx, (batch2, seq2, d_model), jnp.float32)
    w1b, b1b, w2b, b2b = init_params(kp, d_model, d_ff2)
    ref2 = jnp.maximum(x2 @ w1b + b1b, 0.0) @ w2b + b2b
    y2 = jax.block_until_ready(positionwise_ffn(x2, w1b, b1b, w2b, b2b))
    assert y2.shape == (batch2, seq2, d_model)
    assert jnp.allclose(y2, ref2, atol=1e-3, rtol=1e-3)

    # Force the streaming (d_ff-tiled reduction) path to validate it too:
    # d_ff=640 with tk=512 -> divisor-balanced tk=384, d_ff_p=768 (2 slices).
    y3 = jax.block_until_ready(
        positionwise_ffn(x2, w1b, b1b, w2b, b2b, tk=512, _force_stream=True))
    assert jnp.allclose(y3, ref2, atol=1e-3, rtol=1e-3)

    # Streaming path with more slices (tk=128 -> 5 slices), bf16 MXU.
    y4 = jax.block_until_ready(
        positionwise_ffn(x2, w1b, b1b, w2b, b2b, tk=128, _force_stream=True,
                         compute_dtype=jnp.bfloat16))
    assert jnp.allclose(y4, ref2, atol=1e-1, rtol=1e-1)

    print("KERNEL_OK")
</pallas_src>

<mosaic_0001>
module attributes {stable_mosaic.version = 11 : i64} {
  func.func @_ffn_resident_kernel(%arg0: i32, %arg1: memref<16x128xf32, #tpu.memory_space<vmem>>, %arg2: memref<128x256xf32, #tpu.memory_space<vmem>>, %arg3: memref<1x256xf32, #tpu.memory_space<vmem>>, %arg4: memref<256x128xf32, #tpu.memory_space<vmem>>, %arg5: memref<1x128xf32, #tpu.memory_space<vmem>>, %arg6: memref<16x128xf32, #tpu.memory_space<vmem>>) attributes {dimension_semantics = [#tpu.dimension_semantics<parallel>], iteration_bounds = array<i64: 1>, scalar_prefetch = 0 : i64, scratch_operands = 0 : i64, tpu.core_type = #tpu.core_type<tc>, window_params = [{transform_indices = @transform_0, window_bounds = array<i64: 16, 128>}, {pipeline_mode = #tpu.pipeline_mode<synchronous>, transform_indices = @transform_1, window_bounds = array<i64: 128, 256>}, {pipeline_mode = #tpu.pipeline_mode<synchronous>, transform_indices = @transform_2, window_bounds = array<i64: 1, 256>}, {pipeline_mode = #tpu.pipeline_mode<synchronous>, transform_indices = @transform_3, window_bounds = array<i64: 256, 128>}, {pipeline_mode = #tpu.pipeline_mode<synchronous>, transform_indices = @transform_4, window_bounds = array<i64: 1, 128>}, {transform_indices = @transform_5, window_bounds = array<i64: 16, 128>}]} {
    %c0 = arith.constant 0 : index
    %c0_0 = arith.constant 0 : index
    %0 = vector.load %arg1[%c0, %c0_0] : memref<16x128xf32, #tpu.memory_space<vmem>>, vector<16x128xf32>
    %c0_1 = arith.constant 0 : index
    %c0_2 = arith.constant 0 : index
    %1 = vector.load %arg2[%c0_1, %c0_2] : memref<128x256xf32, #tpu.memory_space<vmem>>, vector<128x256xf32>
    %cst = arith.constant dense<0.000000e+00> : vector<16x256xf32>
    %2 = tpu.matmul %0, %1, %cst {dimension_numbers = #tpu.dot_dimension_numbers<[1], [0], [0], [1], [0, 0, 1, 1], [], []>} : vector<16x128xf32>, vector<128x256xf32>, vector<16x256xf32> -> vector<16x256xf32>
    %c0_3 = arith.constant 0 : index
    %c0_4 = arith.constant 0 : index
    %3 = vector.load %arg3[%c0_3, %c0_4] : memref<1x256xf32, #tpu.memory_space<vmem>>, vector<1x256xf32>
    %4 = vector.broadcast %3 : vector<1x256xf32> to vector<16x256xf32>
    %5 = arith.addf %2, %4 : vector<16x256xf32>
    %cst_5 = arith.constant 0.000000e+00 : f32
    %6 = vector.broadcast %cst_5 : f32 to vector<16x256xf32>
    %7 = arith.maximumf %5, %6 : vector<16x256xf32>
    %c0_6 = arith.constant 0 : index
    %c0_7 = arith.constant 0 : index
    %8 = vector.load %arg4[%c0_6, %c0_7] : memref<256x128xf32, #tpu.memory_space<vmem>>, vector<256x128xf32>
    %cst_8 = arith.constant dense<0.000000e+00> : vector<16x128xf32>
    %9 = tpu.matmul %7, %8, %cst_8 {dimension_numbers = #tpu.dot_dimension_numbers<[1], [0], [0], [1], [0, 0, 1, 1], [], []>} : vector<16x256xf32>, vector<256x128xf32>, vector<16x128xf32> -> vector<16x128xf32>
    %c0_9 = arith.constant 0 : index
    %c0_10 = arith.constant 0 : index
    %10 = vector.load %arg5[%c0_9, %c0_10] : memref<1x128xf32, #tpu.memory_space<vmem>>, vector<1x128xf32>
    %11 = vector.broadcast %10 : vector<1x128xf32> to vector<16x128xf32>
    %12 = arith.addf %9, %11 : vector<16x128xf32>
    %c0_11 = arith.constant 0 : index
    %c0_12 = arith.constant 0 : index
    %13 = vector.load %arg6[%c0_11, %c0_12] : memref<16x128xf32, #tpu.memory_space<vmem>>, vector<16x128xf32>
    tpu.vector_store %arg6[%c0_11, %c0_12], %12 {strides = array<i32>} : memref<16x128xf32, #tpu.memory_space<vmem>>, vector<16x128xf32>,
    return
  }
  func.func @transform_0(%arg0: i32) -> (i32, i32) {
    %c0_i32 = arith.constant 0 : i32
    %c0_i32_0 = arith.constant 0 : i32
    return %arg0, %c0_i32 : i32, i32
  }
  func.func @transform_1(%arg0: i32) -> (i32, i32) {
    %c0_i32 = arith.constant 0 : i32
    %c0_i32_0 = arith.constant 0 : i32
    %c0_i32_1 = arith.constant 0 : i32
    return %c0_i32, %c0_i32_0 : i32, i32
  }
  func.func @transform_2(%arg0: i32) -> (i32, i32) {
    %c0_i32 = arith.constant 0 : i32
    %c0_i32_0 = arith.constant 0 : i32
    %c0_i32_1 = arith.constant 0 : i32
    return %c0_i32, %c0_i32_0 : i32, i32
  }
  func.func @transform_3(%arg0: i32) -> (i32, i32) {
    %c0_i32 = arith.constant 0 : i32
    %c0_i32_0 = arith.constant 0 : i32
    %c0_i32_1 = arith.constant 0 : i32
    return %c0_i32, %c0_i32_0 : i32, i32
  }
  func.func @transform_4(%arg0: i32) -> (i32, i32) {
    %c0_i32 = arith.constant 0 : i32
    %c0_i32_0 = arith.constant 0 : i32
    %c0_i32_1 = arith.constant 0 : i32
    return %c0_i32, %c0_i32_0 : i32, i32
  }
  func.func @transform_5(%arg0: i32) -> (i32, i32) {
    %c0_i32 = arith.constant 0 : i32
    %c0_i32_0 = arith.constant 0 : i32
    return %arg0, %c0_i32 : i32, i32
  }
}

</mosaic_0001>

<llo_original>
// kernel: tpu_custom_call.1
$region0: #{tpu_custom_call.1}
  #allocation0 [shape = 'u32[]', space=smem, size = 0x4, offset = 0x4, fixed_abs, tag = 'smem constant byte address 0x4 - core index']
  #allocation1 [shape = 'u32[72,128]{1,0:T(1,128)}', space=vmem, size = 0x9000, scoped, tag = 'internal scratch']
  %s0 = inlined_call_operand.hbm [shape: f32[16,128], index: 0, kind: input, shape index: {}]
  %s1 = inlined_call_operand.hbm [shape: f32[128,256], index: 1, kind: input, shape index: {}]
  %s2 = inlined_call_operand.hbm [shape: f32[1,256], index: 2, kind: input, shape index: {}]
  %s3 = inlined_call_operand.hbm [shape: f32[256,128], index: 3, kind: input, shape index: {}]
  %s4 = inlined_call_operand.vmem [shape: f32[1,128], index: 4, kind: input, shape index: {}]
  %s5 = inlined_call_operand.hbm [shape: f32[16,128], index: 5, kind: output, shape index: {}]
  %s6 = sld [smem:[#allocation0]]
  $region46: #{tpu_custom_call.1} parent=0
    _
  %s8 = ssub.s32 1, %s6
  %s9 = scalar_select 0, %s8, %s6
  $region1: #{tpu_custom_call.1} parent=0
    #allocation2 [shape = 'u8[8192]{0}', space=vmem, size = 0x2000, scoped, tag = 'input window, operand 0, single buffered']
    #allocation3 [shape = 's32[1]{0}', space=sflag, size = 0x4, scoped, tag = 'scoped memory for tpu_custom_call.1']
    #allocation4 [shape = 's32[1]{0}', space=sflag, size = 0x4, scoped, tag = 'scoped memory for tpu_custom_call.1']
    #allocation5 [shape = 'u8[131072]{0}', space=vmem, size = 0x20000, scoped, tag = 'input window, operand 1, single buffered']
    #allocation6 [shape = 's32[1]{0}', space=sflag, size = 0x4, scoped, tag = 'scoped memory for tpu_custom_call.1']
    #allocation7 [shape = 'u8[1024]{0}', space=vmem, size = 0x400, scoped, tag = 'input window, operand 2, single buffered']
    #allocation8 [shape = 'u8[131072]{0}', space=vmem, size = 0x20000, scoped, tag = 'input window, operand 3, single buffered']
    #allocation9 [shape = 's32[1]{0}', space=sflag, size = 0x4, scoped, tag = 'scoped memory for tpu_custom_call.1']
    #allocation10 [shape = 'u8[8192]{0}', space=vmem, size = 0x2000, scoped, tag = 'output window, operand 0, single buffered']
    %10 = vsyncpa [#allocation3], 0
    %11 = vsyncpa [#allocation6], 0
    %12 = vsyncpa [#allocation9], 0
    %13 = vsyncpa [#allocation4], 0
    // Predicated region
    $region2: #{tpu_custom_call.1} parent=1 // pred_check
      _
    $region3: #{tpu_custom_call.1} parent=1 // pred_check_branch
      %15 = sbr.rel (0) target = $region5
    $region4: #{tpu_custom_call.1} parent=1 // pred_region
      %17 = vsyncadd [#allocation3], 0
      %s18 = sshll.u32 %s0, 4
      %s19 = int_to_ptr.hbm [resolvable:$true] %s18
      %s20 = sshll.u32 [#allocation2], 4
      %s21 = int_to_ptr.vmem [resolvable:$true] %s20
      %26 = dma.hbm_to_vmem [thread:$0]  %s19, 256, %s21, [#allocation3], 128, 128, 8
    $region5: #{tpu_custom_call.1} parent=1 // pred_fallthru
      _
    // Predicated region
    $region6: #{tpu_custom_call.1} parent=1 // pred_check
      _
    $region7: #{tpu_custom_call.1} parent=1 // pred_check_branch
      %28 = sbr.rel (0) target = $region9
    $region8: #{tpu_custom_call.1} parent=1 // pred_region
      %30 = vsyncadd [#allocation6], 0
      %s31 = sshll.u32 %s1, 4
      %s32 = int_to_ptr.hbm [resolvable:$true] %s31
      %s33 = sshll.u32 [#allocation5], 4
      %s34 = int_to_ptr.vmem [resolvable:$true] %s33
      %39 = dma.hbm_to_vmem [thread:$0]  %s32, 4096, %s34, [#allocation6], 256, 256, 16
    $region9: #{tpu_custom_call.1} parent=1 // pred_fallthru
      _
    // Predicated region
    $region10: #{tpu_custom_call.1} parent=1 // pred_check
      _
    $region11: #{tpu_custom_call.1} parent=1 // pred_check_branch
      %41 = sbr.rel (0) target = $region13
    $region12: #{tpu_custom_call.1} parent=1 // pred_region
      %43 = vsyncadd [#allocation6], 0
      %s45 = sshll.u32 %s2, 4
      %s46 = int_to_ptr.hbm [resolvable:$true] %s45
      %s47 = sshll.u32 [#allocation7], 4
      %s48 = int_to_ptr.vmem [resolvable:$true] %s47
      %50 = dma.hbm_to_vmem [thread:$0]  %s46, 32, %s48, [#allocation6]
    $region13: #{tpu_custom_call.1} parent=1 // pred_fallthru
      _
    // Predicated region
    $region14: #{tpu_custom_call.1} parent=1 // pred_check
      _
    $region15: #{tpu_custom_call.1} parent=1 // pred_check_branch
      %52 = sbr.rel (0) target = $region17
    $region16: #{tpu_custom_call.1} parent=1 // pred_region
      %54 = vsyncadd [#allocation9], 0
      %s55 = sshll.u32 %s3, 4
      %s56 = int_to_ptr.hbm [resolvable:$true] %s55
      %s57 = sshll.u32 [#allocation8], 4
      %s58 = int_to_ptr.vmem [resolvable:$true] %s57
      %63 = dma.hbm_to_vmem [thread:$0]  %s56, 4096, %s58, [#allocation9], 128, 128, 8
    $region17: #{tpu_custom_call.1} parent=1 // pred_fallthru
      _
    // Predicated region
    $region18: #{tpu_custom_call.1} parent=1 // pred_check
      _
    $region19: #{tpu_custom_call.1} parent=1 // pred_check_branch
      %65 = sbr.rel (0) target = $region21
    $region20: #{tpu_custom_call.1} parent=1 // pred_region
      _
    $region21: #{tpu_custom_call.1} parent=1 // pred_fallthru
      _
    // Predicated region
    $region22: #{tpu_custom_call.1} parent=1 // pred_check
      _
    $region23: #{tpu_custom_call.1} parent=1 // pred_check_branch
      %67 = sbr.rel (0) target = $region25
    $region24: #{tpu_custom_call.1} parent=1 // pred_region
      %69 = dma.done [#allocation3], 256
    $region25: #{tpu_custom_call.1} parent=1 // pred_fallthru
      _
    // Predicated region
    $region26: #{tpu_custom_call.1} parent=1 // pred_check
      _
    $region27: #{tpu_custom_call.1} parent=1 // pred_check_branch
      %71 = sbr.rel (0) target = $region29
    $region28: #{tpu_custom_call.1} parent=1 // pred_region
      %73 = dma.done [#allocation6], 4096
    $region29: #{tpu_custom_call.1} parent=1 // pred_fallthru
      _
    // Predicated region
    $region30: #{tpu_custom_call.1} parent=1 // pred_check
      _
    $region31: #{tpu_custom_call.1} parent=1 // pred_check_branch
      %75 = sbr.rel (0) target = $region33
    $region32: #{tpu_custom_call.1} parent=1 // pred_region
      %77 = dma.done [#allocation6], 32
    $region33: #{tpu_custom_call.1} parent=1 // pred_fallthru
      _
    // Predicated region
    $region34: #{tpu_custom_call.1} parent=1 // pred_check
      _
    $region35: #{tpu_custom_call.1} parent=1 // pred_check_branch
      %79 = sbr.rel (0) target = $region37
    $region36: #{tpu_custom_call.1} parent=1 // pred_region
      %81 = dma.done [#allocation9], 4096
    $region37: #{tpu_custom_call.1} parent=1 // pred_fallthru
      _
    %v82 = vld [vmem:[#allocation2] sm:$0xff]
    %v83 = vld [vmem:[#allocation2 + $0x8] sm:$0xff]
    %v84 = vld [vmem:[#allocation5] sm:$0xff]
    %v85 = vld [vmem:[#allocation5 + $0x8] sm:$0xff]
    %v86 = vld [vmem:[#allocation5 + $0x10] sm:$0xff]
    %v87 = vld [vmem:[#allocation5 + $0x18] sm:$0xff]
    %v88 = vld [vmem:[#allocation5 + $0x20] sm:$0xff]
    %v89 = vld [vmem:[#allocation5 + $0x28] sm:$0xff]
    %v90 = vld [vmem:[#allocation5 + $0x30] sm:$0xff]
    %v91 = vld [vmem:[#allocation5 + $0x38] sm:$0xff]
    %v92 = vld [vmem:[#allocation5 + $0x40] sm:$0xff]
    %v93 = vld [vmem:[#allocation5 + $0x48] sm:$0xff]
    %v94 = vld [vmem:[#allocation5 + $0x50] sm:$0xff]
    %v95 = vld [vmem:[#allocation5 + $0x58] sm:$0xff]
    %v96 = vld [vmem:[#allocation5 + $0x60] sm:$0xff]
    %v97 = vld [vmem:[#allocation5 + $0x68] sm:$0xff]
    %v98 = vld [vmem:[#allocation5 + $0x70] sm:$0xff]
    %v99 = vld [vmem:[#allocation5 + $0x78] sm:$0xff]
    %v100 = vld [vmem:[#allocation5 + $0x80] sm:$0xff]
    %v101 = vld [vmem:[#allocation5 + $0x88] sm:$0xff]
    %v102 = vld [vmem:[#allocation5 + $0x90] sm:$0xff]
    %v103 = vld [vmem:[#allocation5 + $0x98] sm:$0xff]
    %v104 = vld [vmem:[#allocation5 + $0xa0] sm:$0xff]
    %v105 = vld [vmem:[#allocation5 + $0xa8] sm:$0xff]
    %v106 = vld [vmem:[#allocation5 + $0xb0] sm:$0xff]
    %v107 = vld [vmem:[#allocation5 + $0xb8] sm:$0xff]
    %v108 = vld [vmem:[#allocation5 + $0xc0] sm:$0xff]
    %v109 = vld [vmem:[#allocation5 + $0xc8] sm:$0xff]
    %v110 = vld [vmem:[#allocation5 + $0xd0] sm:$0xff]
    %v111 = vld [vmem:[#allocation5 + $0xd8] sm:$0xff]
    %v112 = vld [vmem:[#allocation5 + $0xe0] sm:$0xff]
    %v113 = vld [vmem:[#allocation5 + $0xe8] sm:$0xff]
    %v114 = vld [vmem:[#allocation5 + $0xf0] sm:$0xff]
    %v115 = vld [vmem:[#allocation5 + $0xf8] sm:$0xff]
    %v116 = vld [vmem:[#allocation7] sm:$0x3]
    %v118 = vperm.slane %v116, 0
    %v119 = vperm.slane %v116, 1
    %122 = vmatpush.msra.mxu0 %v114
    %123 = vmatpush.msra.mxu0 %v112
    %124 = vmatpush.msra.mxu0 %v110
    %125 = vmatpush.msra.mxu0 %v108
    %126 = vmatpush.msra.mxu0 %v106
    %127 = vmatpush.msra.mxu0 %v104
    %128 = vmatpush.msra.mxu0 %v102
    %129 = vmatpush.msra.mxu0 %v100
    %130 = vmatpush.msra.mxu0 %v98
    %131 = vmatpush.msra.mxu0 %v96
    %132 = vmatpush.msra.mxu0 %v94
    %133 = vmatpush.msra.mxu0 %v92
    %134 = vmatpush.msra.mxu0 %v90
    %135 = vmatpush.msra.mxu0 %v88
    %136 = vmatpush.msra.mxu0 %v86
    %137 = vmatpush.msra.mxu0 %v84
    %138 = vmatmul.f32.gmra.mxu0 %v82
    %v139 = vpop.f32.mrf.mxu0
    %v140 = vadd.f32 %v118, %v139
    %141 = vmatmul.f32.gmra.mxu0 %v83
    %v142 = vpop.f32.mrf.mxu0
    %v143 = vadd.f32 %v118, %v142
    %144 = vdwg.mxu0
    %145 = vmatpush.msra.mxu0 %v115
    %146 = vmatpush.msra.mxu0 %v113
    %147 = vmatpush.msra.mxu0 %v111
    %148 = vmatpush.msra.mxu0 %v109
    %149 = vmatpush.msra.mxu0 %v107
    %150 = vmatpush.msra.mxu0 %v105
    %151 = vmatpush.msra.mxu0 %v103
    %152 = vmatpush.msra.mxu0 %v101
    %153 = vmatpush.msra.mxu0 %v99
    %154 = vmatpush.msra.mxu0 %v97
    %155 = vmatpush.msra.mxu0 %v95
    %156 = vmatpush.msra.mxu0 %v93
    %157 = vmatpush.msra.mxu0 %v91
    %158 = vmatpush.msra.mxu0 %v89
    %159 = vmatpush.msra.mxu0 %v87
    %160 = vmatpush.msra.mxu0 %v85
    %161 = vmatmul.f32.gmra.mxu0 %v82
    %v162 = vpop.f32.mrf.mxu0
    %v163 = vadd.f32 %v119, %v162
    %164 = vmatmul.f32.gmra.mxu0 %v83
    %v165 = vpop.f32.mrf.mxu0
    %v166 = vadd.f32 %v119, %v165
    %167 = vdwg.mxu0
    %v168 = vmax.f32 %v140, 0.0
    %v169 = vmax.f32 %v163, 0.0
    %v170 = vmax.f32 %v143, 0.0
    %v171 = vmax.f32 %v166, 0.0
    %v172 = vld [vmem:[#allocation8] sm:$0xff]
    %v173 = vld [vmem:[#allocation8 + $0x8] sm:$0xff]
    %v174 = vld [vmem:[#allocation8 + $0x10] sm:$0xff]
    %v175 = vld [vmem:[#allocation8 + $0x18] sm:$0xff]
    %v176 = vld [vmem:[#allocation8 + $0x20] sm:$0xff]
    %v177 = vld [vmem:[#allocation8 + $0x28] sm:$0xff]
    %v178 = vld [vmem:[#allocation8 + $0x30] sm:$0xff]
    %v179 = vld [vmem:[#allocation8 + $0x38] sm:$0xff]
    %v180 = vld [vmem:[#allocation8 + $0x40] sm:$0xff]
    %v181 = vld [vmem:[#allocation8 + $0x48] sm:$0xff]
    %v182 = vld [vmem:[#allocation8 + $0x50] sm:$0xff]
    %v183 = vld [vmem:[#allocation8 + $0x58] sm:$0xff]
    %v184 = vld [vmem:[#allocation8 + $0x60] sm:$0xff]
    %v185 = vld [vmem:[#allocation8 + $0x68] sm:$0xff]
    %v186 = vld [vmem:[#allocation8 + $0x70] sm:$0xff]
    %v187 = vld [vmem:[#allocation8 + $0x78] sm:$0xff]
    %v188 = vld [vmem:[#allocation8 + $0x80] sm:$0xff]
    %v189 = vld [vmem:[#allocation8 + $0x88] sm:$0xff]
    %v190 = vld [vmem:[#allocation8 + $0x90] sm:$0xff]
    %v191 = vld [vmem:[#allocation8 + $0x98] sm:$0xff]
    %v192 = vld [vmem:[#allocation8 + $0xa0] sm:$0xff]
    %v193 = vld [vmem:[#allocation8 + $0xa8] sm:$0xff]
    %v194 = vld [vmem:[#allocation8 + $0xb0] sm:$0xff]
    %v195 = vld [vmem:[#allocation8 + $0xb8] sm:$0xff]
    %v196 = vld [vmem:[#allocation8 + $0xc0] sm:$0xff]
    %v197 = vld [vmem:[#allocation8 + $0xc8] sm:$0xff]
    %v198 = vld [vmem:[#allocation8 + $0xd0] sm:$0xff]
    %v199 = vld [vmem:[#allocation8 + $0xd8] sm:$0xff]
    %v200 = vld [vmem:[#allocation8 + $0xe0] sm:$0xff]
    %v201 = vld [vmem:[#allocation8 + $0xe8] sm:$0xff]
    %v202 = vld [vmem:[#allocation8 + $0xf0] sm:$0xff]
    %v203 = vld [vmem:[#allocation8 + $0xf8] sm:$0xff]
    %v204 = vld [vmem:[%s4] sm:$0x1]
    %v206 = vperm.slane %v204, 0
    %208 = vmatpush.msra.mxu0 %v187
    %209 = vmatpush.msra.mxu0 %v186
    %210 = vmatpush.msra.mxu0 %v185
    %211 = vmatpush.msra.mxu0 %v184
    %212 = vmatpush.msra.mxu0 %v183
    %213 = vmatpush.msra.mxu0 %v182
    %214 = vmatpush.msra.mxu0 %v181
    %215 = vmatpush.msra.mxu0 %v180
    %216 = vmatpush.msra.mxu0 %v179
    %217 = vmatpush.msra.mxu0 %v178
    %218 = vmatpush.msra.mxu0 %v177
    %219 = vmatpush.msra.mxu0 %v176
    %220 = vmatpush.msra.mxu0 %v175
    %221 = vmatpush.msra.mxu0 %v174
    %222 = vmatpush.msra.mxu0 %v173
    %223 = vmatpush.msra.mxu0 %v172
    %224 = vmatmul.f32.gmra.mxu0 %v168
    %v225 = vpop.f32.mrf.mxu0
    %v226 = vadd.f32 %v206, %v225
    %227 = vmatmul.f32.gmra.mxu0 %v170
    %v228 = vpop.f32.mrf.mxu0
    %v229 = vadd.f32 %v206, %v228
    %230 = vdwg.mxu0
    %231 = vmatpush.msra.mxu0 %v203
    %232 = vmatpush.msra.mxu0 %v202
    %233 = vmatpush.msra.mxu0 %v201
    %234 = vmatpush.msra.mxu0 %v200
    %235 = vmatpush.msra.mxu0 %v199
    %236 = vmatpush.msra.mxu0 %v198
    %237 = vmatpush.msra.mxu0 %v197
    %238 = vmatpush.msra.mxu0 %v196
    %239 = vmatpush.msra.mxu0 %v195
    %240 = vmatpush.msra.mxu0 %v194
    %241 = vmatpush.msra.mxu0 %v193
    %242 = vmatpush.msra.mxu0 %v192
    %243 = vmatpush.msra.mxu0 %v191
    %244 = vmatpush.msra.mxu0 %v190
    %245 = vmatpush.msra.mxu0 %v189
    %246 = vmatpush.msra.mxu0 %v188
    %247 = vmatmul.f32.gmra.mxu0 %v169
    %v248 = vpop.f32.mrf.mxu0
    %v249 = vadd.f32 %v226, %v248
    %250 = vmatmul.f32.gmra.mxu0 %v171
    %v251 = vpop.f32.mrf.mxu0
    %v252 = vadd.f32 %v229, %v251
    %253 = vdwg.mxu0
    %254 = vst [vmem:[#allocation10] sm:$0xff] %v249
    %255 = vst [vmem:[#allocation10 + $0x8] sm:$0xff] %v252
    // Predicated region
    $region38: #{tpu_custom_call.1} parent=1 // pred_check
      _
    $region39: #{tpu_custom_call.1} parent=1 // pred_check_branch
      %257 = sbr.rel (0) target = $region41
    $region40: #{tpu_custom_call.1} parent=1 // pred_region
      %259 = vsyncadd [#allocation4], 0
      %s260 = sshll.u32 [#allocation10], 4
      %s261 = int_to_ptr.vmem [resolvable:$true] %s260
      %s262 = sshll.u32 %s5, 4
      %s263 = int_to_ptr.hbm [resolvable:$true] %s262
      %268 = dma.vmem_to_hbm [thread:$0]  %s261, 256, %s263, [#allocation4], 128, 128, 8
    $region41: #{tpu_custom_call.1} parent=1 // pred_fallthru
      _
    // Predicated region
    $region42: #{tpu_custom_call.1} parent=1 // pred_check
      _
    $region43: #{tpu_custom_call.1} parent=1 // pred_check_branch
      %270 = sbr.rel (0) target = $region45
    $region44: #{tpu_custom_call.1} parent=1 // pred_region
      %272 = dma.done [#allocation4], 256
    $region45: #{tpu_custom_call.1} parent=1 // pred_fallthru
      _
    %273 = vsyncpa [#allocation3], 1
    %274 = vsyncpa [#allocation6], 1
    %275 = vsyncpa [#allocation9], 1
    %276 = vsyncpa [#allocation4], 1

</llo_original>
